<compile_context>
chip_gen: v5e
topology: v5e:2x2
jax: 0.10.0
libtpu: 0.0.40
codegen_flags: <defaults>
</compile_context>

<pallas_src>
import math

import jax
import jax.numpy as jnp
from jax.experimental import pallas as pl
from jax.experimental.pallas import tpu as pltpu


def _matmul_bias_kernel(x_ref, w_ref, b_ref, o_ref, acc_ref):
    """Compute one (tm, tn) output tile, reducing over the K grid axis (last).

    x_ref: (tm, tk)   w_ref: (tk, tn)  -- weight pre-transposed to (K, N)
    b_ref: (1, tn)    o_ref: (tm, tn)  acc_ref: (tm, tn) f32 scratch
    """
    k = pl.program_id(2)
    nk = pl.num_programs(2)

    # Partial product for this K slice, accumulated in f32 on the MXU.
    partial = jnp.dot(x_ref[...], w_ref[...], preferred_element_type=jnp.float32)

    @pl.when(k == 0)
    def _():
        acc_ref[...] = jnp.zeros_like(acc_ref)

    @pl.when(k == nk - 1)
    def _():
        # Fuse the last partial + bias + cast directly into the output write,
        # skipping the final accumulator store + reload.
        o_ref[...] = (acc_ref[...] + partial
                      + b_ref[...].astype(jnp.float32)).astype(o_ref.dtype)

    @pl.when(k != nk - 1)
    def _():
        acc_ref[...] += partial


def _round_up(v, m):
    return ((v + m - 1) // m) * m


def _balanced_tile(dim, max_tile, align):
    """Full-dim block if it fits; otherwise an `align`-multiple close to
    dim / ceil(dim / max_tile) so the masked edge block wastes little work."""
    if dim <= max_tile:
        return dim
    nblocks = pl.cdiv(dim, max_tile)
    return min(max_tile, _round_up(pl.cdiv(dim, nblocks), align))


def _k_tile(k, max_tk):
    """K tile must evenly divide (possibly padded) K: garbage in an edge block
    on the reduction axis would corrupt the accumulation."""
    if k <= max_tk:
        return k, k                      # single full-K block, no padding
    k_pad = _round_up(k, 128)            # only pads when K isn't 128-aligned
    cand = (max_tk // 128) * 128
    while cand >= 128:
        if k_pad % cand == 0:
            return cand, k_pad
        cand -= 128
    return 128, k_pad


def prepare_column_parallel_weight(weight):
    """One-time (load-time) layout prep.

    PyTorch ColumnParallelLinear stores weight as (out_per_rank, in_features);
    the kernel wants (in_features, out_per_rank) so K sits on sublanes and N on
    lanes, with no per-tile transpose inside the matmul loop. Call this once
    when loading parameters, NOT per forward call.
    """
    return jnp.asarray(weight).T


def column_parallel_linear(x, weight_t, bias, *, tm=512, tn=512, tk=512,
                           cast_operands_to_bf16=False):
    """Per-rank forward of ColumnParallelLinear: y = x @ W.T + b.

    x:        (..., in_features)
    weight_t: (in_features, out_per_rank)  -- pre-transposed once at load time
              via prepare_column_parallel_weight()
    bias:     (out_per_rank,)
    returns   (..., out_per_rank)

    Copy.forward is identity; Gather.forward is identity for tp_world_size==1.
    Defaults (512) target v6e/v7x bf16/f32 GEMMs; raise tm/tn to 1024 (bf16)
    on v6e/v7x for very large GEMMs, keep 512 on v5e.
    """
    assert tm % 8 == 0 and tn % 128 == 0 and tk % 128 == 0, \
        "tm must be a multiple of 8; tn, tk multiples of 128"

    k_dim = x.shape[-1]
    assert weight_t.shape[0] == k_dim, "weight_t must be (in_features, out_per_rank)"
    n = weight_t.shape[1]
    assert bias.shape == (n,)

    lead_shape = x.shape[:-1]
    m = math.prod(lead_shape) if lead_shape else 1
    out_dtype = x.dtype

    x2d = x.reshape(m, k_dim)
    wt = weight_t
    b2d = bias.reshape(1, n)

    if cast_operands_to_bf16 and x2d.dtype == jnp.float32:
        # Mixed-precision recipe: bf16 operands, f32 accumulation (numerics
        # decision -- best done by storing params/activations in bf16 upstream).
        x2d = x2d.astype(jnp.bfloat16)
        wt = wt.astype(jnp.bfloat16)

    # ---- tile selection -----------------------------------------------------
    tm_ = _balanced_tile(m, tm, 8)
    tn_ = _balanced_tile(n, tn, 128)
    tk_, k_pad = _k_tile(k_dim, tk)

    # Only the reduction axis ever needs real zero padding (rare: K not a
    # multiple of 128 and K > tk). M/N edges are handled by Pallas masked
    # edge blocks (OOB output writes are discarded).
    # TODO(synk): for persistently non-128-aligned K, hoist this weight pad to
    # load time alongside prepare_column_parallel_weight.
    if k_pad != k_dim:
        x2d = jnp.pad(x2d, ((0, 0), (0, k_pad - k_dim)))
        wt = jnp.pad(wt, ((0, k_pad - k_dim), (0, 0)))

    grid_m = pl.cdiv(m, tm_)
    grid_n = pl.cdiv(n, tn_)
    grid_k = k_pad // tk_

    # v7x has 2 TensorCores: make sure a "parallel" axis has >= 2 blocks for
    # small-M (decode) shapes so both cores get work.
    if grid_m == 1 and grid_n == 1 and n >= 256:
        tn_ = _round_up(pl.cdiv(n, 2), 128)
        grid_n = pl.cdiv(n, tn_)

    grid = (grid_m, grid_n, grid_k)

    # ---- VMEM budget / compiler params --------------------------------------
    x_item = x2d.dtype.itemsize
    w_item = wt.dtype.itemsize
    b_item = b2d.dtype.itemsize
    out_item = jnp.dtype(out_dtype).itemsize
    vmem_bytes = (2 * (tm_ * tk_ * x_item + tk_ * tn_ * w_item + tn_ * b_item)
                  + 2 * tm_ * tn_ * out_item      # double-buffered output
                  + tm_ * tn_ * 4)                # f32 accumulator scratch
    # Explicit limit: covers v5e's 16 MiB default scoped VMEM, stays within
    # v7x's 64 MiB physical VMEM.
    vmem_limit = int(min(64 << 20, max(32 << 20, vmem_bytes + (2 << 20))))

    cost = pl.CostEstimate(
        flops=2 * m * n * k_dim,
        transcendentals=0,
        bytes_accessed=(x2d.size * x_item + wt.size * w_item
                        + b2d.size * b_item + m * n * out_item),
    )

    out = pl.pallas_call(
        _matmul_bias_kernel,
        out_shape=jax.ShapeDtypeStruct((m, n), out_dtype),
        grid_spec=pltpu.PrefetchScalarGridSpec(
            num_scalar_prefetch=0,
            grid=grid,
            in_specs=[
                pl.BlockSpec((tm_, tk_), lambda i, j, k: (i, k)),   # x tile
                pl.BlockSpec((tk_, tn_), lambda i, j, k: (k, j)),   # W.T tile (K, N)
                pl.BlockSpec((1, tn_), lambda i, j, k: (0, j)),     # bias tile
            ],
            out_specs=pl.BlockSpec((tm_, tn_), lambda i, j, k: (i, j)),
            scratch_shapes=[pltpu.VMEM((tm_, tn_), jnp.float32)],
        ),
        compiler_params=pltpu.CompilerParams(
            dimension_semantics=("parallel", "parallel", "arbitrary"),
            vmem_limit_bytes=vmem_limit),
        cost_estimate=cost,
    )(x2d, wt, b2d)

    return out.reshape(*lead_shape, n)


def init_column_parallel_linear(key, in_features, out_features,
                                tp_rank=0, tp_world_size=1,
                                dtype=jnp.float32):
    """Deterministic init mirroring ColumnParallelLinear.reset_parameters:
    master weight ~ U(-sqrt(1/in_features), sqrt(1/in_features)), then the
    rank's row-shard is taken; bias is zeros. Returns PyTorch-layout weight."""
    assert out_features % tp_world_size == 0
    out_per_rank = out_features // tp_world_size
    bound = math.sqrt(1.0 / in_features)
    master_weight = jax.random.uniform(
        key, (out_features, in_features), dtype=dtype,
        minval=-bound, maxval=bound)
    weight = master_weight[tp_rank * out_per_rank:(tp_rank + 1) * out_per_rank]
    bias = jnp.zeros((out_per_rank,), dtype=dtype)
    return weight, bias


if __name__ == "__main__":
    key = jax.random.PRNGKey(0)
    kx, kw, kx2, kw2, kb2, kx3, kw3, kb3 = jax.random.split(key, 8)

    # --- check 1: small module-like shapes (batch=2, seq=8, hidden=32) -------
    batch, seq, in_features, out_features = 2, 8, 32, 32
    tp_rank, tp_world_size = 0, 1   # single-rank; Copy/Gather are identities

    x = jax.random.normal(kx, (batch, seq, in_features), dtype=jnp.float32)
    weight, bias = init_column_parallel_linear(
        kw, in_features, out_features, tp_rank=tp_rank,
        tp_world_size=tp_world_size, dtype=jnp.float32)
    weight_t = prepare_column_parallel_weight(weight)   # once, at "load" time

    y = jax.block_until_ready(column_parallel_linear(x, weight_t, bias))
    y_ref = x @ weight.T + bias
    assert y.shape == (batch, seq, out_features // tp_world_size)
    assert jnp.allclose(y, y_ref, atol=1e-5, rtol=1e-5)

    # --- check 2: K accumulation + masked M/N edge blocks (small tiles) ------
    b2, s2, k2, n2 = 2, 9, 384, 320        # M=18 (edge), K=384 (3 steps), N=320 (edge)
    x2 = jax.random.normal(kx2, (b2, s2, k2), dtype=jnp.float32)
    w2 = jax.random.uniform(kw2, (n2, k2), dtype=jnp.float32,
                            minval=-0.1, maxval=0.1)
    bs2 = jax.random.normal(kb2, (n2,), dtype=jnp.float32)
    y2 = jax.block_until_ready(
        column_parallel_linear(x2, prepare_column_parallel_weight(w2), bs2,
                               tm=8, tn=128, tk=128))
    assert jnp.allclose(y2, x2 @ w2.T + bs2, atol=1e-4, rtol=1e-4)

    # --- check 3: small-M / large-N decode shape -> N auto-split into 2 blocks
    # so both v7x TensorCores get work (defaults: one 8x512 output block).
    m3, k3, n3 = 8, 256, 512
    x3 = jax.random.normal(kx3, (m3, k3), dtype=jnp.float32)
    w3 = jax.random.uniform(kw3, (n3, k3), dtype=jnp.float32,
                            minval=-0.05, maxval=0.05)
    bs3 = jax.random.normal(kb3, (n3,), dtype=jnp.float32)
    y3 = jax.block_until_ready(
        column_parallel_linear(x3, prepare_column_parallel_weight(w3), bs3))
    assert jnp.allclose(y3, x3 @ w3.T + bs3, atol=1e-4, rtol=1e-4)

    print("KERNEL_OK")
</pallas_src>

<mosaic_0001>
module attributes {stable_mosaic.version = 11 : i64} {
  func.func @_matmul_bias_kernel(%arg0: i32, %arg1: i32, %arg2: i32, %arg3: memref<16x32xf32, #tpu.memory_space<vmem>>, %arg4: memref<32x32xf32, #tpu.memory_space<vmem>>, %arg5: memref<1x32xf32, #tpu.memory_space<vmem>>, %arg6: memref<16x32xf32, #tpu.memory_space<vmem>>, %arg7: memref<16x32xf32, #tpu.memory_space<vmem>>) attributes {dimension_semantics = [#tpu.dimension_semantics<parallel>, #tpu.dimension_semantics<parallel>, #tpu.dimension_semantics<arbitrary>], iteration_bounds = array<i64: 1, 1, 1>, scalar_prefetch = 0 : i64, scratch_operands = 1 : i64, tpu.core_type = #tpu.core_type<tc>, window_params = [{transform_indices = @transform_0, window_bounds = array<i64: 16, 32>}, {transform_indices = @transform_1, window_bounds = array<i64: 32, 32>}, {transform_indices = @transform_2, window_bounds = array<i64: 1, 32>}, {transform_indices = @transform_3, window_bounds = array<i64: 16, 32>}]} {
    %c0 = arith.constant 0 : index
    %c0_0 = arith.constant 0 : index
    %0 = vector.load %arg3[%c0, %c0_0] : memref<16x32xf32, #tpu.memory_space<vmem>>, vector<16x32xf32>
    %c0_1 = arith.constant 0 : index
    %c0_2 = arith.constant 0 : index
    %1 = vector.load %arg4[%c0_1, %c0_2] : memref<32x32xf32, #tpu.memory_space<vmem>>, vector<32x32xf32>
    %cst = arith.constant dense<0.000000e+00> : vector<16x32xf32>
    %2 = tpu.matmul %0, %1, %cst {dimension_numbers = #tpu.dot_dimension_numbers<[1], [0], [0], [1], [0, 0, 1, 1], [], []>} : vector<16x32xf32>, vector<32x32xf32>, vector<16x32xf32> -> vector<16x32xf32>
    %c0_i32 = arith.constant 0 : i32
    %3 = arith.cmpi eq, %arg2, %c0_i32 : i32
    %4 = arith.extui %3 : i1 to i32
    %c0_i32_3 = arith.constant 0 : i32
    %5 = arith.cmpi ne, %4, %c0_i32_3 : i32
    scf.if %5 {
      %cst_8 = arith.constant 0.000000e+00 : f32
      %12 = vector.broadcast %cst_8 : f32 to vector<16x32xf32>
      %c0_9 = arith.constant 0 : index
      %c0_10 = arith.constant 0 : index
      %13 = vector.load %arg7[%c0_9, %c0_10] : memref<16x32xf32, #tpu.memory_space<vmem>>, vector<16x32xf32>
      tpu.vector_store %arg7[%c0_9, %c0_10], %12 {strides = array<i32>} : memref<16x32xf32, #tpu.memory_space<vmem>>, vector<16x32xf32>,
    } else {
    }
    %c0_i32_4 = arith.constant 0 : i32
    %6 = arith.cmpi eq, %arg2, %c0_i32_4 : i32
    %7 = arith.extui %6 : i1 to i32
    %c0_i32_5 = arith.constant 0 : i32
    %8 = arith.cmpi ne, %7, %c0_i32_5 : i32
    scf.if %8 {
      %c0_8 = arith.constant 0 : index
      %c0_9 = arith.constant 0 : index
      %12 = vector.load %arg7[%c0_8, %c0_9] : memref<16x32xf32, #tpu.memory_space<vmem>>, vector<16x32xf32>
      %13 = arith.addf %12, %2 : vector<16x32xf32>
      %c0_10 = arith.constant 0 : index
      %c0_11 = arith.constant 0 : index
      %14 = vector.load %arg5[%c0_10, %c0_11] : memref<1x32xf32, #tpu.memory_space<vmem>>, vector<1x32xf32>
      %15 = vector.broadcast %14 : vector<1x32xf32> to vector<16x32xf32>
      %16 = arith.addf %13, %15 : vector<16x32xf32>
      %c0_12 = arith.constant 0 : index
      %c0_13 = arith.constant 0 : index
      %17 = vector.load %arg6[%c0_12, %c0_13] : memref<16x32xf32, #tpu.memory_space<vmem>>, vector<16x32xf32>
      tpu.vector_store %arg6[%c0_12, %c0_13], %16 {strides = array<i32>} : memref<16x32xf32, #tpu.memory_space<vmem>>, vector<16x32xf32>,
    } else {
    }
    %c0_i32_6 = arith.constant 0 : i32
    %9 = arith.cmpi ne, %arg2, %c0_i32_6 : i32
    %10 = arith.extui %9 : i1 to i32
    %c0_i32_7 = arith.constant 0 : i32
    %11 = arith.cmpi ne, %10, %c0_i32_7 : i32
    scf.if %11 {
      %c0_8 = arith.constant 0 : index
      %c0_9 = arith.constant 0 : index
      %12 = vector.load %arg7[%c0_8, %c0_9] : memref<16x32xf32, #tpu.memory_space<vmem>>, vector<16x32xf32>
      %13 = arith.addf %12, %2 : vector<16x32xf32>
      %c0_10 = arith.constant 0 : index
      %c0_11 = arith.constant 0 : index
      %14 = vector.load %arg7[%c0_10, %c0_11] : memref<16x32xf32, #tpu.memory_space<vmem>>, vector<16x32xf32>
      tpu.vector_store %arg7[%c0_10, %c0_11], %13 {strides = array<i32>} : memref<16x32xf32, #tpu.memory_space<vmem>>, vector<16x32xf32>,
    } else {
    }
    return
  }
  func.func @transform_0(%arg0: i32, %arg1: i32, %arg2: i32) -> (i32, i32) {
    %c0_i32 = arith.constant 0 : i32
    return %arg0, %arg2 : i32, i32
  }
  func.func @transform_1(%arg0: i32, %arg1: i32, %arg2: i32) -> (i32, i32) {
    %c0_i32 = arith.constant 0 : i32
    return %arg2, %arg1 : i32, i32
  }
  func.func @transform_2(%arg0: i32, %arg1: i32, %arg2: i32) -> (i32, i32) {
    %c0_i32 = arith.constant 0 : i32
    %c0_i32_0 = arith.constant 0 : i32
    return %c0_i32, %arg1 : i32, i32
  }
  func.func @transform_3(%arg0: i32, %arg1: i32, %arg2: i32) -> (i32, i32) {
    %c0_i32 = arith.constant 0 : i32
    return %arg0, %arg1 : i32, i32
  }
}

</mosaic_0001>

<llo_original>
// kernel: tpu_custom_call.1
$region0: #{tpu_custom_call.1}
  #allocation0 [shape = 'u32[]', space=smem, size = 0x4, offset = 0x4, fixed_abs, tag = 'smem constant byte address 0x4 - core index']
  #allocation1 [shape = 'u32[72,128]{1,0:T(1,128)}', space=vmem, size = 0x9000, scoped, tag = 'internal scratch']
  #allocation2 [shape = 'f32[16,32]{1,0:T(8,128)}', space=vmem, size = 0x2000, scoped, tag = 'scratch operand']
  %s0 = inlined_call_operand.hbm [shape: f32[16,32], index: 0, kind: input, shape index: {}]
  %s1 = inlined_call_operand.hbm [shape: f32[32,32], index: 1, kind: input, shape index: {}]
  %s2 = inlined_call_operand.vmem [shape: f32[1,32], index: 2, kind: input, shape index: {}]
  %s3 = inlined_call_operand.hbm [shape: f32[16,32], index: 3, kind: output, shape index: {}]
  %s4 = sld [smem:[#allocation0]]
  $region38: #{tpu_custom_call.1} parent=0
    _
  %s6 = ssub.s32 1, %s4
  %s7 = scalar_select 0, %s6, %s4
  $region1: #{tpu_custom_call.1} parent=0
    #allocation3 [shape = 'u8[8192]{0}', space=vmem, size = 0x2000, scoped, tag = 'input window, operand 0, single buffered']
    #allocation4 [shape = 's32[1]{0}', space=sflag, size = 0x4, scoped, tag = 'scoped memory for tpu_custom_call.1']
    #allocation5 [shape = 's32[1]{0}', space=sflag, size = 0x4, scoped, tag = 'scoped memory for tpu_custom_call.1']
    #allocation6 [shape = 'u8[16384]{0}', space=vmem, size = 0x4000, scoped, tag = 'input window, operand 1, single buffered']
    #allocation7 [shape = 's32[1]{0}', space=sflag, size = 0x4, scoped, tag = 'scoped memory for tpu_custom_call.1']
    #allocation8 [shape = 'u8[8192]{0}', space=vmem, size = 0x2000, scoped, tag = 'output window, operand 0, single buffered']
    %8 = vsyncpa [#allocation4], 0
    %9 = vsyncpa [#allocation7], 0
    %10 = vsyncpa [#allocation5], 0
    // Predicated region
    $region2: #{tpu_custom_call.1} parent=1 // pred_check
      _
    $region3: #{tpu_custom_call.1} parent=1 // pred_check_branch
      %12 = sbr.rel (0) target = $region5
    $region4: #{tpu_custom_call.1} parent=1 // pred_region
      %14 = vsyncadd [#allocation4], 0
      %s15 = sshll.u32 %s0, 4
      %s16 = int_to_ptr.hbm [resolvable:$true] %s15
      %s17 = sshll.u32 [#allocation3], 4
      %s18 = int_to_ptr.vmem [resolvable:$true] %s17
      %23 = dma.hbm_to_vmem [thread:$0]  %s16, 256, %s18, [#allocation4], 128, 128, 8
    $region5: #{tpu_custom_call.1} parent=1 // pred_fallthru
      _
    // Predicated region
    $region6: #{tpu_custom_call.1} parent=1 // pred_check
      _
    $region7: #{tpu_custom_call.1} parent=1 // pred_check_branch
      %25 = sbr.rel (0) target = $region9
    $region8: #{tpu_custom_call.1} parent=1 // pred_region
      %27 = vsyncadd [#allocation7], 0
      %s28 = sshll.u32 %s1, 4
      %s29 = int_to_ptr.hbm [resolvable:$true] %s28
      %s30 = sshll.u32 [#allocation6], 4
      %s31 = int_to_ptr.vmem [resolvable:$true] %s30
      %36 = dma.hbm_to_vmem [thread:$0]  %s29, 512, %s31, [#allocation7], 128, 128, 8
    $region9: #{tpu_custom_call.1} parent=1 // pred_fallthru
      _
    // Predicated region
    $region10: #{tpu_custom_call.1} parent=1 // pred_check
      _
    $region11: #{tpu_custom_call.1} parent=1 // pred_check_branch
      %38 = sbr.rel (0) target = $region13
    $region12: #{tpu_custom_call.1} parent=1 // pred_region
      _
    $region13: #{tpu_custom_call.1} parent=1 // pred_fallthru
      _
    // Predicated region
    $region14: #{tpu_custom_call.1} parent=1 // pred_check
      _
    $region15: #{tpu_custom_call.1} parent=1 // pred_check_branch
      %40 = sbr.rel (0) target = $region17
    $region16: #{tpu_custom_call.1} parent=1 // pred_region
      %42 = dma.done [#allocation4], 256
    $region17: #{tpu_custom_call.1} parent=1 // pred_fallthru
      _
    // Predicated region
    $region18: #{tpu_custom_call.1} parent=1 // pred_check
      _
    $region19: #{tpu_custom_call.1} parent=1 // pred_check_branch
      %44 = sbr.rel (0) target = $region21
    $region20: #{tpu_custom_call.1} parent=1 // pred_region
      %46 = dma.done [#allocation7], 512
    $region21: #{tpu_custom_call.1} parent=1 // pred_fallthru
      _
    %v47 = vld [vmem:[#allocation3] sm:$0xff]
    %v48 = vld [vmem:[#allocation3 + $0x8] sm:$0xff]
    %v49 = vld [vmem:[#allocation6] sm:$0xff]
    %v50 = vld [vmem:[#allocation6 + $0x8] sm:$0xff]
    %v51 = vld [vmem:[#allocation6 + $0x10] sm:$0xff]
    %v52 = vld [vmem:[#allocation6 + $0x18] sm:$0xff]
    %vm53 = vcmask 261120
    %v55 = vsel %vm53, %v47, 0
    %v58 = vsel %vm53, %v48, 0
    %60 = vmatpush.msra.mxu0 0.0
    %61 = vmatpush.msra.mxu0 0.0
    %62 = vmatpush.msra.mxu0 0.0
    %63 = vmatpush.msra.mxu0 0.0
    %64 = vmatpush.msra.mxu0 0.0
    %65 = vmatpush.msra.mxu0 0.0
    %66 = vmatpush.msra.mxu0 0.0
    %67 = vmatpush.msra.mxu0 0.0
    %68 = vmatpush.msra.mxu0 0.0
    %69 = vmatpush.msra.mxu0 0.0
    %70 = vmatpush.msra.mxu0 0.0
    %71 = vmatpush.msra.mxu0 0.0
    %72 = vmatpush.msra.mxu0 %v52
    %73 = vmatpush.msra.mxu0 %v51
    %74 = vmatpush.msra.mxu0 %v50
    %75 = vmatpush.msra.mxu0 %v49
    %76 = vmatmul.f32.gmra.mxu0 %v55
    %v77 = vpop.f32.mrf.mxu0
    %v78 = vadd.f32 0.0, %v77
    %79 = vmatmul.f32.gmra.mxu0 %v58
    %v80 = vpop.f32.mrf.mxu0
    %v81 = vadd.f32 0.0, %v80
    %82 = vdwg.mxu0
    %p83 = scmp.eq.s32.totalorder 0, 0
    // Predicated region
    $region22: #{tpu_custom_call.1} parent=1 // pred_check
      %p84 = pneg %p83
    $region23: #{tpu_custom_call.1} parent=1 // pred_check_branch
      %86 = sbr.rel (%p84) target = $region25
    $region24: #{tpu_custom_call.1} parent=1 // pred_region
      %87 = vst.msk [vmem:[#allocation2] sm:$0xff] %vm53, 0.0
      %88 = vst.msk [vmem:[#allocation2 + $0x8] sm:$0xff] %vm53, 0.0
      %v89 = vld [vmem:[#allocation2] sm:$0xff]
      %v90 = vld [vmem:[#allocation2 + $0x8] sm:$0xff]
      %v91 = vadd.f32 %v89, %v78
      %v92 = vadd.f32 %v90, %v81
      %v93 = vld [vmem:[%s2] sm:$0x1]
      %v95 = vperm.slane %v93, 0
      %v97 = vadd.f32 %v91, %v95
      %v98 = vadd.f32 %v92, %v95
      %99 = vst.msk [vmem:[#allocation8] sm:$0xff] %vm53, %v97
      %100 = vst.msk [vmem:[#allocation8 + $0x8] sm:$0xff] %vm53, %v98
    $region25: #{tpu_custom_call.1} parent=1 // pred_fallthru
      _
    %p101 = scmp.ne.s32.totalorder 0, 0
    // Predicated region
    $region26: #{tpu_custom_call.1} parent=1 // pred_check
      %p102 = pneg %p101
    $region27: #{tpu_custom_call.1} parent=1 // pred_check_branch
      %104 = sbr.rel (%p102) target = $region29
    $region28: #{tpu_custom_call.1} parent=1 // pred_region
      %v105 = vld [vmem:[#allocation2] sm:$0xff]
      %v106 = vld [vmem:[#allocation2 + $0x8] sm:$0xff]
      %v107 = vadd.f32 %v105, %v78
      %v108 = vadd.f32 %v106, %v81
      %109 = vst.msk [vmem:[#allocation2] sm:$0xff] %vm53, %v107
      %110 = vst.msk [vmem:[#allocation2 + $0x8] sm:$0xff] %vm53, %v108
    $region29: #{tpu_custom_call.1} parent=1 // pred_fallthru
      _
    // Predicated region
    $region30: #{tpu_custom_call.1} parent=1 // pred_check
      _
    $region31: #{tpu_custom_call.1} parent=1 // pred_check_branch
      %112 = sbr.rel (0) target = $region33
    $region32: #{tpu_custom_call.1} parent=1 // pred_region
      %114 = vsyncadd [#allocation5], 0
      %s115 = sshll.u32 [#allocation8], 4
      %s116 = int_to_ptr.vmem [resolvable:$true] %s115
      %s117 = sshll.u32 %s3, 4
      %s118 = int_to_ptr.hbm [resolvable:$true] %s117
      %123 = dma.vmem_to_hbm [thread:$0]  %s116, 256, %s118, [#allocation5], 128, 128, 8
    $region33: #{tpu_custom_call.1} parent=1 // pred_fallthru
      _
    // Predicated region
    $region34: #{tpu_custom_call.1} parent=1 // pred_check
      _
    $region35: #{tpu_custom_call.1} parent=1 // pred_check_branch
      %125 = sbr.rel (0) target = $region37
    $region36: #{tpu_custom_call.1} parent=1 // pred_region
      %127 = dma.done [#allocation5], 256
    $region37: #{tpu_custom_call.1} parent=1 // pred_fallthru
      _
    %128 = vsyncpa [#allocation4], 1
    %129 = vsyncpa [#allocation7], 1
    %130 = vsyncpa [#allocation5], 1

</llo_original>
